<compile_context>
chip_gen: v7x
topology: tpu7x:2x2x1
jax: 0.10.0
libtpu: 0.0.40
codegen_flags: <defaults>
</compile_context>

<pallas_src>
import functools
from types import SimpleNamespace

import jax
import jax.numpy as jnp
from jax.experimental import pallas as pl
from jax.experimental.pallas import tpu as pltpu


def _vmem_limit_bytes():
    """Generation-aware VMEM budget: ~3/4 of physical, capped at 96 MiB.
    v7x (64 MiB phys) -> 48 MiB; v5e/v6e (128 MiB phys) -> 96 MiB."""
    try:
        cap = int(pltpu.get_tpu_info().vmem_capacity_bytes)
    except Exception:
        cap = 64 * 1024 * 1024  # conservative fallback, safe on every chip
    return max(32 * 1024 * 1024, min(96 * 1024 * 1024, (cap * 3) // 4))


def _plan_spec_tiles(ft, row_tile_cap=256):
    """Factor flattened F*T into (ROWS, LANES) plus a sublane row-tile TR.

    LANES = 128 (lane-dense) when possible; TR is a multiple of 8 dividing
    ROWS, capped at `row_tile_cap` sublanes (~TR*128*4 bytes per f32 stream).
    """
    if ft % 128 == 0:
        lanes = 128
        rows = ft // 128
    else:
        # TODO(synk): pad F*T to a multiple of 128 instead of this masked-lane fallback.
        lanes = ft
        rows = 1
    if rows >= 8 and rows % 8 == 0:
        tr = min(row_tile_cap, rows)
        tr -= tr % 8
        while rows % tr:
            tr -= 8
    else:
        tr = rows
    return rows, lanes, tr


# ---------------------------------------------------------------------------
# Kernel A: net_frame.forward_multiframe (proxy)
#   frames (N*B, C, S) --tiled over S--> mean pool -> Linear(C,K) -> ReLU
#   Pooled sums accumulate in a tiny VMEM scratch; the C=3 -> K contraction is
#   an unrolled VPU MAC at the final grid step (MXU would be badly underfilled).
# ---------------------------------------------------------------------------
def _frame_net_kernel(frames_ref, wf_ref, bf_ref, feat_ref, acc_ref, *, inv_s):
    s = pl.program_id(0)

    @pl.when(s == 0)
    def _():
        acc_ref[...] = jnp.zeros_like(acc_ref)

    acc_ref[...] += jnp.sum(frames_ref[...], axis=-1)          # (NB, C)

    @pl.when(s == pl.num_programs(0) - 1)
    def _():
        pooled = acc_ref[...] * inv_s                           # (NB, C)
        wf = wf_ref[...]                                        # (C, K)
        out = jnp.broadcast_to(bf_ref[...], feat_ref.shape)     # (NB, K)
        for c in range(wf.shape[0]):                            # C=3: unroll
            out = out + pooled[:, c:c + 1] * wf[c:c + 1, :]
        feat_ref[...] = jnp.maximum(out, 0.0)


def frame_net_forward(frames_flat, wf, bf, *, vmem_limit, s_tile_cap=2048):
    NB, C, S = frames_flat.shape
    K = wf.shape[1]
    if S % 128 == 0 and S > s_tile_cap:
        ts = s_tile_cap - (s_tile_cap % 128)
        while S % ts:
            ts -= 128
    else:
        ts = S
    n_tiles = S // ts
    kernel = functools.partial(_frame_net_kernel, inv_s=1.0 / float(S))
    return pl.pallas_call(
        kernel,
        out_shape=jax.ShapeDtypeStruct((NB, K), jnp.float32),
        grid=(n_tiles,),
        in_specs=[pl.BlockSpec((NB, C, ts), lambda i: (0, 0, i)),
                  pl.BlockSpec((C, K), lambda i: (0, 0)),
                  pl.BlockSpec((1, K), lambda i: (0, 0))],
        out_specs=pl.BlockSpec((NB, K), lambda i: (0, 0)),
        scratch_shapes=[pltpu.VMEM((NB, C), jnp.float32)],
        compiler_params=pltpu.CompilerParams(
            dimension_semantics=("arbitrary",),
            vmem_limit_bytes=vmem_limit),
    )(frames_flat, wf, bf)


# ---------------------------------------------------------------------------
# Kernel B (fused): preprocessing + sound net + sigmoid + weighted BCE.
# Per (b, row-tile) block of the (ROWS, LANES)-viewed spectrogram:
#   mm     = mag_mix + 1e-10
#   weight = clamp(log1p(mm), 0.001, 10)            (weighted path only)
#   lm     = log(mm)
#   z_n    = sum_k feat[n,b,k] * relu(w1_k*lm + b1_k)   (K unrolled, SMEM scalars)
#   pred_n = sigmoid(z_n)          gt_n = (mag_n > 0.5*mm)
#   loss  += weight * (softplus(z_n) - gt_n*z_n)    (BCE from logits, elementwise
#                                                    into a per-b resident block)
# ---------------------------------------------------------------------------
def _fused_kernel(mm_ref, mags_ref, feat_ref, w1_ref, b1_ref, *out_refs,
                  batch, weighted):
    if weighted:
        mm_eps_ref, weight_ref, gt_ref, pred_ref, loss_ref = out_refs
    else:
        mm_eps_ref, gt_ref, pred_ref, loss_ref = out_refs
        weight_ref = None

    N = mags_ref.shape[0]
    K = w1_ref.shape[0]
    b = pl.program_id(0)
    r = pl.program_id(1)

    mm = mm_ref[...] + 1e-10                                    # (TR, LANES) f32
    mm_eps_ref[...] = mm
    if weighted:
        w = jnp.clip(jnp.log1p(mm), 0.001, 10.0)
        weight_ref[...] = w
    lm = jnp.log(mm)

    # Hoist all per-(n,k) visual-feature scalars for this batch element out of
    # the K loop (SMEM scalar reads; b is constant within the block).
    feats = [[feat_ref[(n * batch + b) * K + k] for k in range(K)]
             for n in range(N)]
    w1 = [w1_ref[k] for k in range(K)]
    b1 = [b1_ref[k] for k in range(K)]

    # K-unrolled logit accumulation; N live (TR, LANES) accumulators.
    zs = [jnp.zeros(mm.shape, jnp.float32) for _ in range(N)]
    for k in range(K):
        h = jnp.maximum(lm * w1[k] + b1[k], 0.0)                # (TR, LANES)
        for n in range(N):
            zs[n] = zs[n] + feats[n][k] * h

    loss_acc = jnp.zeros(mm.shape, jnp.float32)
    for n in range(N):
        z = zs[n]
        pred_ref[n] = jax.nn.sigmoid(z).astype(pred_ref.dtype)   # bf16 store
        g = mags_ref[n] > 0.5 * mm
        gt_ref[n] = g.astype(gt_ref.dtype)                       # bf16 store
        gf = g.astype(jnp.float32)
        # numerically stable softplus(z) = max(z,0) + log1p(exp(-|z|))
        sp = jnp.maximum(z, 0.0) + jnp.log1p(jnp.exp(-jnp.abs(z)))
        bce = sp - gf * z
        loss_acc = loss_acc + (w * bce if weighted else bce)

    # Per-b resident elementwise loss partial: block index depends only on b,
    # so it stays in VMEM across the (arbitrary) row-tile axis and is written
    # back to HBM once per batch element.  Summed by one tiny XLA reduce.
    @pl.when(r == 0)
    def _():
        loss_ref[...] = jnp.zeros_like(loss_ref)
    loss_ref[...] += loss_acc


def fused_forward(mm3, mags4, feat_flat, w1, b1, *, tr, weighted, mask_dtype,
                  vmem_limit):
    B, ROWS, LANES = mm3.shape
    N = mags4.shape[0]
    r_tiles = ROWS // tr
    sq = pl.Squeezed()

    kernel = functools.partial(_fused_kernel, batch=B, weighted=weighted)

    in_specs = [
        pl.BlockSpec((sq, tr, LANES), lambda b, r: (b, r, 0)),        # mag_mix
        pl.BlockSpec((N, sq, tr, LANES), lambda b, r: (0, b, r, 0)),  # mags
        pl.BlockSpec(memory_space=pltpu.MemorySpace.SMEM),            # feat
        pl.BlockSpec(memory_space=pltpu.MemorySpace.SMEM),            # w1
        pl.BlockSpec(memory_space=pltpu.MemorySpace.SMEM),            # b1
    ]

    out_shape = [jax.ShapeDtypeStruct((B, ROWS, LANES), jnp.float32)]  # mm+eps
    out_specs = [pl.BlockSpec((sq, tr, LANES), lambda b, r: (b, r, 0))]
    if weighted:
        out_shape.append(jax.ShapeDtypeStruct((B, ROWS, LANES), jnp.float32))
        out_specs.append(pl.BlockSpec((sq, tr, LANES), lambda b, r: (b, r, 0)))
    out_shape += [
        jax.ShapeDtypeStruct((N, B, ROWS, LANES), mask_dtype),         # gt
        jax.ShapeDtypeStruct((N, B, ROWS, LANES), mask_dtype),         # pred
        jax.ShapeDtypeStruct((B, tr, LANES), jnp.float32),             # loss part
    ]
    out_specs += [
        pl.BlockSpec((N, sq, tr, LANES), lambda b, r: (0, b, r, 0)),
        pl.BlockSpec((N, sq, tr, LANES), lambda b, r: (0, b, r, 0)),
        pl.BlockSpec((sq, tr, LANES), lambda b, r: (b, 0, 0)),
    ]

    return pl.pallas_call(
        kernel,
        out_shape=tuple(out_shape),
        grid=(B, r_tiles),
        in_specs=in_specs,
        out_specs=tuple(out_specs),
        compiler_params=pltpu.CompilerParams(
            # batch axis parallel (v7x: >=2 steps shard across both TCs);
            # row-tile axis arbitrary (loss block accumulates across it).
            dimension_semantics=("parallel", "arbitrary"),
            vmem_limit_bytes=vmem_limit),
    )(mm3, mags4, feat_flat, w1, b1)


# ---------------------------------------------------------------------------
# NetWrapper.forward equivalent
# ---------------------------------------------------------------------------
def net_wrapper_forward(batch_data, args, params):
    mag_mix = jnp.asarray(batch_data['mag_mix'], jnp.float32)     # (B, F, T)
    mags = batch_data['mags']                                     # (N,B,F,T) or list
    frames = batch_data['frames']                                 # (N,B,C,Tf,H,W) or list
    N = args.num_mix

    if args.log_freq:
        # TODO(synk): warpgrid + F.grid_sample log-frequency remap not implemented.
        raise NotImplementedError("log_freq warp not implemented")
    if not args.binary_mask:
        # TODO(synk): ratio-mask path (mags/mag_mix, clamp 0..5) not wired.
        raise NotImplementedError("only binary_mask=True is implemented")
    if args.output_activation != 'sigmoid':
        # TODO(synk): only the 'sigmoid' output activation is implemented.
        raise NotImplementedError("only sigmoid activation is implemented")

    mags_stacked = (jnp.stack(list(mags), axis=0)
                    if isinstance(mags, (list, tuple)) else jnp.asarray(mags))
    frames_all = (jnp.stack(list(frames), axis=0)
                  if isinstance(frames, (list, tuple)) else jnp.asarray(frames))
    assert mags_stacked.shape[0] == N and frames_all.shape[0] == N

    B, F, T = mag_mix.shape
    FT = F * T
    C = frames_all.shape[2]
    weighted = bool(args.weighted_loss)
    mask_dtype = getattr(args, 'mask_dtype', jnp.bfloat16)
    vmem_limit = _vmem_limit_bytes()

    # Kernel A: frame net (all N mixtures batched together), tiled over S.
    frames_flat = frames_all.reshape(N * B, C, -1)                # (N*B, C, S)
    feat = frame_net_forward(frames_flat, params['wf'], params['bf'],
                             vmem_limit=vmem_limit)               # (N*B, K)
    K = feat.shape[-1]
    feat_flat = feat.reshape(-1)                                  # SMEM scalars

    # Kernel B: fused preprocess + sound net + sigmoid + weighted BCE, with the
    # F*T axis repacked as (ROWS, 128) for full sublane/lane occupancy.
    rows, lanes, tr = _plan_spec_tiles(FT)
    mm3 = mag_mix.reshape(B, rows, lanes)
    mags4 = mags_stacked.reshape(N, B, rows, lanes)
    results = fused_forward(
        mm3, mags4, feat_flat,
        params['w1'].reshape(-1), params['b1'].reshape(-1),
        tr=tr, weighted=weighted, mask_dtype=mask_dtype, vmem_limit=vmem_limit)

    if weighted:
        mm_eps3, weight3, gt4, pred4, loss_parts = results
        weight = weight3.reshape(B, F, T)
    else:
        mm_eps3, gt4, pred4, loss_parts = results
        weight = jnp.ones((B, F, T), jnp.float32)

    # criterion assumed: per-mixture mean of weight*BCE, then mean over N.
    err_mask = (jnp.sum(loss_parts) / jnp.float32(N * B * FT)).reshape(1)

    mag_mix_eps = mm_eps3.reshape(B, F, T)
    gt5 = gt4.reshape(N, B, F, T)
    pred5 = pred4.reshape(N, B, F, T)

    outputs = {'pred_masks': [pred5[n] for n in range(N)],
               'gt_masks': [gt5[n] for n in range(N)],
               'mag_mix': mag_mix_eps,
               'mags': [mags_stacked[n] for n in range(N)],
               'weight': weight}
    return err_mask, outputs


if __name__ == "__main__":
    args = SimpleNamespace(num_mix=2, log_freq=False, weighted_loss=True,
                           binary_mask=True, output_activation='sigmoid')

    B, F, T = 2, 32, 32          # batch, freq bins, STFT frames (F*T = 1024)
    C, Tf, H, W = 3, 3, 8, 8     # video: channels, frames, height, width
    K = 32                       # visual feature / hidden dim
    N = args.num_mix

    key = jax.random.PRNGKey(0)
    k_mag, k_mags, k_frm, k_wf, k_w1 = jax.random.split(key, 5)

    mag_mix = jax.random.uniform(k_mag, (B, F, T), jnp.float32, 0.0, 2.0)
    mags = jax.random.uniform(k_mags, (N, B, F, T), jnp.float32, 0.0, 2.0)
    frames = jax.random.normal(k_frm, (N, B, C, Tf, H, W), jnp.float32)

    params = {
        'wf': 0.1 * jax.random.normal(k_wf, (C, K), jnp.float32),   # frame-net Linear
        'bf': 0.01 * jnp.ones((1, K), jnp.float32),
        'w1': 0.1 * jax.random.normal(k_w1, (1, K), jnp.float32),   # sound-net affine
        'b1': 0.01 * jnp.ones((1, K), jnp.float32),
    }

    batch_data = {'mag_mix': mag_mix, 'mags': mags, 'frames': frames}

    err_mask, outputs = net_wrapper_forward(batch_data, args, params)
    jax.block_until_ready(err_mask)
    for p in outputs['pred_masks']:
        jax.block_until_ready(p)

    # ---- pure-JAX reference of the same simplified forward (sanity check) ----
    pooled = frames.reshape(N * B, C, -1).mean(axis=-1)
    feat_r = jnp.maximum(pooled @ params['wf'] + params['bf'], 0.0).reshape(N, B, K)
    mm_r = mag_mix + 1e-10
    w_r = (jnp.clip(jnp.log1p(mm_r), 0.001, 10.0) if args.weighted_loss
           else jnp.ones_like(mm_r))
    lm_r = jnp.log(mm_r)
    h_r = jnp.maximum(lm_r[..., None] * params['w1'].reshape(-1)
                      + params['b1'].reshape(-1), 0.0)                 # (B,F,T,K)
    loss_r = 0.0
    for n in range(N):
        z = jnp.sum(h_r * feat_r[n][:, None, None, :], axis=-1)
        p_r = jax.nn.sigmoid(z)
        g_r = (mags[n] > 0.5 * mm_r).astype(jnp.float32)
        bce = jnp.maximum(z, 0.0) + jnp.log1p(jnp.exp(-jnp.abs(z))) - g_r * z
        loss_r = loss_r + jnp.mean(w_r * bce)
        assert jnp.allclose(outputs['gt_masks'][n].astype(jnp.float32), g_r)
        assert jnp.allclose(outputs['pred_masks'][n].astype(jnp.float32), p_r,
                            atol=2e-2)
    loss_r = loss_r / N
    assert jnp.allclose(err_mask[0], loss_r, rtol=1e-3, atol=1e-5)
    assert jnp.allclose(outputs['weight'], w_r, rtol=1e-5, atol=1e-7)
    assert jnp.allclose(outputs['mag_mix'], mm_r)

    assert err_mask.shape == (1,)
    assert outputs['pred_masks'][0].shape == (B, F, T)
    assert outputs['gt_masks'][0].shape == (B, F, T)
    print("KERNEL_OK")
</pallas_src>

<mosaic_0001>
module attributes {stable_mosaic.version = 11 : i64} {
  func.func @_frame_net_kernel(%arg0: i32, %arg1: memref<4x3x192xf32, #tpu.memory_space<vmem>>, %arg2: memref<3x32xf32, #tpu.memory_space<vmem>>, %arg3: memref<1x32xf32, #tpu.memory_space<vmem>>, %arg4: memref<4x32xf32, #tpu.memory_space<vmem>>, %arg5: memref<4x3xf32, #tpu.memory_space<vmem>>) attributes {dimension_semantics = [#tpu.dimension_semantics<arbitrary>], iteration_bounds = array<i64: 1>, scalar_prefetch = 0 : i64, scratch_operands = 1 : i64, tpu.core_type = #tpu.core_type<tc>, window_params = [{transform_indices = @transform_0, window_bounds = array<i64: 4, 3, 192>}, {pipeline_mode = #tpu.pipeline_mode<synchronous>, transform_indices = @transform_1, window_bounds = array<i64: 3, 32>}, {pipeline_mode = #tpu.pipeline_mode<synchronous>, transform_indices = @transform_2, window_bounds = array<i64: 1, 32>}, {pipeline_mode = #tpu.pipeline_mode<synchronous>, transform_indices = @transform_3, window_bounds = array<i64: 4, 32>}]} {
    %c0_i32 = arith.constant 0 : i32
    %0 = arith.cmpi eq, %arg0, %c0_i32 : i32
    %1 = arith.extui %0 : i1 to i32
    %c0_i32_0 = arith.constant 0 : i32
    %2 = arith.cmpi ne, %1, %c0_i32_0 : i32
    scf.if %2 {
      %cst_9 = arith.constant 0.000000e+00 : f32
      %11 = vector.broadcast %cst_9 : f32 to vector<4x3xf32>
      %c0_10 = arith.constant 0 : index
      %c0_11 = arith.constant 0 : index
      %12 = vector.load %arg5[%c0_10, %c0_11] : memref<4x3xf32, #tpu.memory_space<vmem>>, vector<4x3xf32>
      tpu.vector_store %arg5[%c0_10, %c0_11], %11 {strides = array<i32>} : memref<4x3xf32, #tpu.memory_space<vmem>>, vector<4x3xf32>,
    } else {
    }
    %c0 = arith.constant 0 : index
    %c0_1 = arith.constant 0 : index
    %3 = vector.load %arg5[%c0, %c0_1] : memref<4x3xf32, #tpu.memory_space<vmem>>, vector<4x3xf32>
    %c0_2 = arith.constant 0 : index
    %c0_3 = arith.constant 0 : index
    %c0_4 = arith.constant 0 : index
    %4 = vector.load %arg1[%c0_2, %c0_3, %c0_4] : memref<4x3x192xf32, #tpu.memory_space<vmem>>, vector<4x3x192xf32>
    %cst = arith.constant dense<0.000000e+00> : vector<4x3xf32>
    %5 = vector.multi_reduction <add>, %4, %cst [2] : vector<4x3x192xf32> to vector<4x3xf32>
    %6 = arith.addf %3, %5 : vector<4x3xf32>
    %c0_5 = arith.constant 0 : index
    %c0_6 = arith.constant 0 : index
    %7 = vector.load %arg5[%c0_5, %c0_6] : memref<4x3xf32, #tpu.memory_space<vmem>>, vector<4x3xf32>
    tpu.vector_store %arg5[%c0_5, %c0_6], %6 {strides = array<i32>} : memref<4x3xf32, #tpu.memory_space<vmem>>, vector<4x3xf32>,
    %c0_i32_7 = arith.constant 0 : i32
    %8 = arith.cmpi eq, %arg0, %c0_i32_7 : i32
    %9 = arith.extui %8 : i1 to i32
    %c0_i32_8 = arith.constant 0 : i32
    %10 = arith.cmpi ne, %9, %c0_i32_8 : i32
    scf.if %10 {
      %c0_9 = arith.constant 0 : index
      %c0_10 = arith.constant 0 : index
      %11 = vector.load %arg5[%c0_9, %c0_10] : memref<4x3xf32, #tpu.memory_space<vmem>>, vector<4x3xf32>
      %cst_11 = arith.constant 0.00520833349 : f32
      %12 = vector.broadcast %cst_11 : f32 to vector<4x3xf32>
      %13 = arith.mulf %11, %12 : vector<4x3xf32>
      %c0_12 = arith.constant 0 : index
      %c0_13 = arith.constant 0 : index
      %14 = vector.load %arg2[%c0_12, %c0_13] : memref<3x32xf32, #tpu.memory_space<vmem>>, vector<3x32xf32>
      %c0_14 = arith.constant 0 : index
      %c0_15 = arith.constant 0 : index
      %15 = vector.load %arg3[%c0_14, %c0_15] : memref<1x32xf32, #tpu.memory_space<vmem>>, vector<1x32xf32>
      %16 = vector.shape_cast %15 : vector<1x32xf32> to vector<1x32xf32>
      %17 = vector.broadcast %16 : vector<1x32xf32> to vector<4x32xf32>
      %18 = vector.extract_strided_slice %13 {offsets = [0, 0], sizes = [4, 1], strides = [1, 1]} : vector<4x3xf32> to vector<4x1xf32>
      %19 = vector.extract_strided_slice %14 {offsets = [0, 0], sizes = [1, 32], strides = [1, 1]} : vector<3x32xf32> to vector<1x32xf32>
      %20 = vector.broadcast %18 : vector<4x1xf32> to vector<4x32xf32>
      %21 = vector.broadcast %19 : vector<1x32xf32> to vector<4x32xf32>
      %22 = arith.mulf %20, %21 : vector<4x32xf32>
      %23 = arith.addf %17, %22 : vector<4x32xf32>
      %24 = vector.extract_strided_slice %13 {offsets = [0, 1], sizes = [4, 1], strides = [1, 1]} : vector<4x3xf32> to vector<4x1xf32>
      %25 = vector.extract_strided_slice %14 {offsets = [1, 0], sizes = [1, 32], strides = [1, 1]} : vector<3x32xf32> to vector<1x32xf32>
      %26 = vector.broadcast %24 : vector<4x1xf32> to vector<4x32xf32>
      %27 = vector.broadcast %25 : vector<1x32xf32> to vector<4x32xf32>
      %28 = arith.mulf %26, %27 : vector<4x32xf32>
      %29 = arith.addf %23, %28 : vector<4x32xf32>
      %30 = vector.extract_strided_slice %13 {offsets = [0, 2], sizes = [4, 1], strides = [1, 1]} : vector<4x3xf32> to vector<4x1xf32>
      %31 = vector.extract_strided_slice %14 {offsets = [2, 0], sizes = [1, 32], strides = [1, 1]} : vector<3x32xf32> to vector<1x32xf32>
      %32 = vector.broadcast %30 : vector<4x1xf32> to vector<4x32xf32>
      %33 = vector.broadcast %31 : vector<1x32xf32> to vector<4x32xf32>
      %34 = arith.mulf %32, %33 : vector<4x32xf32>
      %35 = arith.addf %29, %34 : vector<4x32xf32>
      %cst_16 = arith.constant 0.000000e+00 : f32
      %36 = vector.broadcast %cst_16 : f32 to vector<4x32xf32>
      %37 = arith.maximumf %35, %36 : vector<4x32xf32>
      %c0_17 = arith.constant 0 : index
      %c0_18 = arith.constant 0 : index
      %38 = vector.load %arg4[%c0_17, %c0_18] : memref<4x32xf32, #tpu.memory_space<vmem>>, vector<4x32xf32>
      tpu.vector_store %arg4[%c0_17, %c0_18], %37 {strides = array<i32>} : memref<4x32xf32, #tpu.memory_space<vmem>>, vector<4x32xf32>,
    } else {
    }
    return
  }
  func.func @transform_0(%arg0: i32) -> (i32, i32, i32) {
    %c0_i32 = arith.constant 0 : i32
    %c0_i32_0 = arith.constant 0 : i32
    %c0_i32_1 = arith.constant 0 : i32
    return %c0_i32, %c0_i32_0, %arg0 : i32, i32, i32
  }
  func.func @transform_1(%arg0: i32) -> (i32, i32) {
    %c0_i32 = arith.constant 0 : i32
    %c0_i32_0 = arith.constant 0 : i32
    %c0_i32_1 = arith.constant 0 : i32
    return %c0_i32, %c0_i32_0 : i32, i32
  }
  func.func @transform_2(%arg0: i32) -> (i32, i32) {
    %c0_i32 = arith.constant 0 : i32
    %c0_i32_0 = arith.constant 0 : i32
    %c0_i32_1 = arith.constant 0 : i32
    return %c0_i32, %c0_i32_0 : i32, i32
  }
  func.func @transform_3(%arg0: i32) -> (i32, i32) {
    %c0_i32 = arith.constant 0 : i32
    %c0_i32_0 = arith.constant 0 : i32
    %c0_i32_1 = arith.constant 0 : i32
    return %c0_i32, %c0_i32_0 : i32, i32
  }
}

</mosaic_0001>

<llo_original>
// kernel: tpu_custom_call.1
$region0: #{tpu_custom_call.1}
  #allocation0 [shape = 'u32[]', space=smem, size = 0x4, offset = 0x4, fixed_abs, tag = 'smem constant byte address 0x4 - core index']
  #allocation1 [shape = 'u32[144,128]{1,0:T(1,128)}', space=vmem, size = 0x12000, scoped, tag = 'internal scratch']
  #allocation2 [shape = 'f32[4,3]{1,0:T(4,128)}', space=vmem, size = 0x800, scoped, tag = 'scratch operand']
  %s0 = inlined_call_operand.vmem [shape: f32[4,3,192], index: 0, kind: input, shape index: {}]
  %s1 = inlined_call_operand.vmem [shape: f32[3,32], index: 1, kind: input, shape index: {}]
  %s2 = inlined_call_operand.vmem [shape: f32[1,32], index: 2, kind: input, shape index: {}]
  %s3 = inlined_call_operand.hbm [shape: f32[4,32], index: 3, kind: output, shape index: {}]
  %s4 = sld [smem:[#allocation0]]
  $region30: #{tpu_custom_call.1} parent=0
    _
  %s6 = ssub.s32 1, %s4
  %s7 = scalar_select 0, %s6, %s4
  $region1: #{tpu_custom_call.1} parent=0
    #allocation3 [shape = 'u8[2048]{0}', space=vmem, size = 0x800, scoped, tag = 'output window, operand 0, single buffered']
    #allocation4 [shape = 's32[1]{0}', space=sflag, size = 0x4, scoped, tag = 'scoped memory for tpu_custom_call.1']
    %8 = vsyncpa [#allocation4], 0
    // Predicated region
    $region2: #{tpu_custom_call.1} parent=1 // pred_check
      _
    $region3: #{tpu_custom_call.1} parent=1 // pred_check_branch
      %10 = sbr.rel (0) target = $region5
    $region4: #{tpu_custom_call.1} parent=1 // pred_region
      _
    $region5: #{tpu_custom_call.1} parent=1 // pred_fallthru
      _
    // Predicated region
    $region6: #{tpu_custom_call.1} parent=1 // pred_check
      _
    $region7: #{tpu_custom_call.1} parent=1 // pred_check_branch
      %12 = sbr.rel (0) target = $region9
    $region8: #{tpu_custom_call.1} parent=1 // pred_region
      _
    $region9: #{tpu_custom_call.1} parent=1 // pred_fallthru
      _
    // Predicated region
    $region10: #{tpu_custom_call.1} parent=1 // pred_check
      _
    $region11: #{tpu_custom_call.1} parent=1 // pred_check_branch
      %14 = sbr.rel (0) target = $region13
    $region12: #{tpu_custom_call.1} parent=1 // pred_region
      _
    $region13: #{tpu_custom_call.1} parent=1 // pred_fallthru
      _
    %p15 = scmp.eq.s32.totalorder 0, 0
    // Predicated region
    $region14: #{tpu_custom_call.1} parent=1 // pred_check
      %p16 = pneg %p15
    $region15: #{tpu_custom_call.1} parent=1 // pred_check_branch
      %18 = sbr.rel (%p16) target = $region17
    $region16: #{tpu_custom_call.1} parent=1 // pred_region
      %vm19 = vcmask 19456
      %20 = vst.msk [vmem:[#allocation2] sm:$0xf] %vm19, 0.0
    $region17: #{tpu_custom_call.1} parent=1 // pred_fallthru
      _
    %v21 = vld [vmem:[#allocation2] sm:$0xf]
    %v22 = vld [vmem:[%s0] sm:$0x77]
    %v23 = vld [vmem:[%s0 + $0x8] sm:$0x77]
    %v24 = vld [vmem:[%s0 + $0x10] sm:$0x77]
    %v25 = vld [vmem:[%s0 + $0x18] sm:$0x77]
    %v30 = vcombine.high %v22, %v22
    %v31 = vcombine.high %v23, %v23
    %v32 = vcombine.high %v24, %v24
    %v33 = vcombine.high %v25, %v25
    %vm38 = vcmask 1042432
    %v39 = vsel %vm38, %v22, 0.0
    %vm40 = vcmask 518144
    %v41 = vsel %vm40, %v30, 0.0
    %v42 = vadd.f32 %v39, %v41
    %43 = vadd.xlane.f32.xlu0 %v42
    %v44 = vpop.xlane.xlu0 %43
    %v45 = vsel %vm38, %v23, 0.0
    %v46 = vsel %vm40, %v31, 0.0
    %v47 = vadd.f32 %v45, %v46
    %48 = vadd.xlane.f32.xlu0 %v47
    %v49 = vpop.xlane.xlu0 %48
    %v50 = vsel %vm38, %v24, 0.0
    %v51 = vsel %vm40, %v32, 0.0
    %v52 = vadd.f32 %v50, %v51
    %53 = vadd.xlane.f32.xlu0 %v52
    %v54 = vpop.xlane.xlu0 %53
    %v55 = vsel %vm38, %v25, 0.0
    %v56 = vsel %vm40, %v33, 0.0
    %v57 = vadd.f32 %v55, %v56
    %58 = vadd.xlane.f32.xlu0 %v57
    %v59 = vpop.xlane.xlu0 %58
    %v64 = vlaneseq
    %v65 = vand.u32 %v64, 127
    %v66 = vlaneseq
    %v67 = vshrl.u32 %v66, 7
    %v68 = vsub.s32 %v65, %v67
    %v69 = vrot.slane %v44, %v68
    %v70 = vlaneseq
    %v71 = vshrl.u32 %v70, 7
    %v72 = vsub.s32 %v65, %v71
    %v73 = vrot.slane %v49, %v72
    %v74 = vlaneseq
    %v75 = vshrl.u32 %v74, 7
    %v76 = vsub.s32 %v65, %v75
    %v77 = vrot.slane %v54, %v76
    %v78 = vlaneseq
    %v79 = vshrl.u32 %v78, 7
    %v80 = vsub.s32 %v65, %v79
    %v81 = vrot.slane %v59, %v80
    %vm82 = vcmask 1041409
    %v83 = vsel %vm82, %v73, %v69
    %vm84 = vcmask 1042434
    %v85 = vsel %vm84, %v77, %v83
    %vm86 = vcmask 1043459
    %v87 = vsel %vm86, %v81, %v85
    %v89 = vadd.f32 %v21, %v87
    %vm90 = vcmask 19456
    %91 = vst.msk [vmem:[#allocation2] sm:$0xf] %vm90, %v89
    // Predicated region
    $region18: #{tpu_custom_call.1} parent=1 // pred_check
      %p92 = pneg %p15
    $region19: #{tpu_custom_call.1} parent=1 // pred_check_branch
      %94 = sbr.rel (%p92) target = $region21
    $region20: #{tpu_custom_call.1} parent=1 // pred_region
      %v95 = vld [vmem:[#allocation2] sm:$0xf]
      %v96 = vmul.f32 %v95, 0.0052083335
      %v97 = vld [vmem:[%s1] sm:$0x7]
      %v98 = vld [vmem:[%s2] sm:$0x1]
      %v100 = vlaneseq
      %v101 = vshrl.u32 %v100, 7
      %v102 = vsub.s32 0, %v101
      %v103 = vrot.slane %v98, %v102
      %106 = vset.pattern.permute.xlu0 0
      %107 = vperm.xlu0 %106, %v96
      %v108 = vpop.permute.xlu0 %107
      %v110 = vlaneseq
      %v111 = vshrl.u32 %v110, 7
      %v112 = vsub.s32 0, %v111
      %v113 = vrot.slane %v97, %v112
      %v114 = vmul.f32 %v108, %v113
      %v115 = vadd.f32 %v103, %v114
      %116 = vset.pattern.permute.xlu0 1
      %117 = vperm.xlu0 %116, %v96
      %v118 = vpop.permute.xlu0 %117
      %v120 = vlaneseq
      %v121 = vshrl.u32 %v120, 7
      %v122 = vsub.s32 1, %v121
      %v123 = vrot.slane %v97, %v122
      %v124 = vmul.f32 %v118, %v123
      %v125 = vadd.f32 %v115, %v124
      %126 = vset.pattern.permute.xlu0 2
      %127 = vperm.xlu0 %126, %v96
      %v128 = vpop.permute.xlu0 %127
      %v130 = vlaneseq
      %v131 = vshrl.u32 %v130, 7
      %v132 = vsub.s32 2, %v131
      %v133 = vrot.slane %v97, %v132
      %v134 = vmul.f32 %v128, %v133
      %v135 = vadd.f32 %v125, %v134
      %v136 = vmax.f32 %v135, 0.0
      %vm137 = vcmask 257024
      %138 = vst.msk [vmem:[#allocation3] sm:$0xf] %vm137, %v136
    $region21: #{tpu_custom_call.1} parent=1 // pred_fallthru
      _
    // Predicated region
    $region22: #{tpu_custom_call.1} parent=1 // pred_check
      _
    $region23: #{tpu_custom_call.1} parent=1 // pred_check_branch
      %140 = sbr.rel (0) target = $region25
    $region24: #{tpu_custom_call.1} parent=1 // pred_region
      %s142 = ssub.s32 64, 64
      %143 = vsyncadd [#allocation4], %s142
      %s145 = sshll.u32 [#allocation3], 4
      %s146 = int_to_ptr.vmem [resolvable:$true] %s145
      %148 = dma.vmem_to_hbm [thread:$0]  %s146, 64, %s3, [#allocation4]
    $region25: #{tpu_custom_call.1} parent=1 // pred_fallthru
      _
    // Predicated region
    $region26: #{tpu_custom_call.1} parent=1 // pred_check
      _
    $region27: #{tpu_custom_call.1} parent=1 // pred_check_branch
      %150 = sbr.rel (0) target = $region29
    $region28: #{tpu_custom_call.1} parent=1 // pred_region
      %151 = dma.done [#allocation4], 64
    $region29: #{tpu_custom_call.1} parent=1 // pred_fallthru
      _
    %152 = vsyncpa [#allocation4], 1

</llo_original>
